<compile_context>
chip_gen: v6e
topology: v6e:2x2x1
jax: 0.10.0
libtpu: 0.0.40
codegen_flags: <defaults>
</compile_context>

<pallas_src>
import functools

import jax
import jax.numpy as jnp
from jax.experimental import pallas as pl
from jax.experimental.pallas import tpu as pltpu


def _dw_sep_kernel(x_ref, dw_w_ref, dw_b_ref, pw_w_ref, pw_b_ref, o_ref,
                   *, stride, th, wo, cc):
    """One (batch, output-row-tile) grid step.

    x_ref:    (s*s*Cin, Hpp, Wpp)  phase-decomposed, zero-padded image
                                   (resident across the row tiles of one image)
    dw_w_ref: (Cin, K, K)          depthwise filter, BN scale folded in (f32)
    dw_b_ref: (Cin, 1, 1)          depthwise BN bias
    pw_w_ref: (Cout, Cin)          pointwise filter, BN scale folded in (bf16)
    pw_b_ref: (Cout, 1)            pointwise BN bias
    o_ref:    (Cout, th*wo)        output row tile, spatially flattened
    """
    s = stride
    cin, k, _ = dw_w_ref.shape
    t = pl.program_id(1)
    row0 = t * th
    if th % 8 == 0:
        row0 = pl.multiple_of(row0, 8)

    w_all = dw_w_ref[...].astype(jnp.float32)        # (cin, k, k), hoisted
    b_all = dw_b_ref[...].astype(jnp.float32)        # (cin, 1, 1)

    hidden = []
    # Channel-chunked depthwise accumulation: each chunk's (nch, th, wo) f32
    # accumulator sees all K*K taps while it is register/VMEM-hot, then is
    # bias+ReLU'd, flattened and cast to bf16 so its f32 live range ends
    # before the next chunk starts.
    for c0 in range(0, cin, cc):
        nch = min(cin, c0 + cc) - c0
        # Per-tap weight slices hoisted out of the accumulation loop.
        w_taps = [[w_all[c0:c0 + nch, kh:kh + 1, kw:kw + 1] for kw in range(k)]
                  for kh in range(k)]
        acc = jnp.zeros((nch, th, wo), jnp.float32)
        for kh in range(k):
            ph, qh = kh % s, kh // s
            for pw in range(min(s, k)):
                # One lane-aligned, full-width band load per (chunk, kh, phase
                # column).  kw shifts below are in-register lane shifts (XLU),
                # not per-tap lane-offset loads from the ref.
                pidx = ph * s + pw
                band = x_ref[pl.ds(pidx * cin + c0, nch),
                             pl.ds(row0 + qh, th), :].astype(jnp.float32)
                for qw in range((k - pw + s - 1) // s):
                    kw = qw * s + pw
                    tap = band[:, :, qw:qw + wo]     # roll-equivalent lane shift
                    acc = acc + tap * w_taps[kh][kw]
        h = jnp.maximum(acc + b_all[c0:c0 + nch], 0.0)
        # TODO(synk): the (nch, th, wo) -> (nch, th*wo) flatten is a relayout
        # when wo % 128 != 0; it is ~1/(K*K) of the depthwise tap work.
        hidden.append(h.reshape(nch, th * wo).astype(pw_w_ref.dtype))

    rhs = hidden[0] if len(hidden) == 1 else jnp.concatenate(hidden, axis=0)
    # Pointwise 1x1 conv: a single MXU matmul, spatial axis on lanes.
    y = jnp.dot(pw_w_ref[...], rhs, preferred_element_type=jnp.float32)
    y = jnp.maximum(y + pw_b_ref[...].astype(jnp.float32), 0.0)
    o_ref[...] = y.astype(o_ref.dtype)


def _fold_bn(gamma, beta, mean, var, eps=1e-5):
    scale = gamma / jnp.sqrt(var + eps)
    return scale, beta - mean * scale


def _rup(v, m):
    return -(-v // m) * m


def _vmem_capacity_bytes():
    try:
        return int(pltpu.get_tpu_info().vmem_capacity_bytes)
    except Exception:
        return 64 << 20          # conservative (v7x) default


def _pick_row_tile(ho, wo, cin, cout, ss, hpp, wpp, budget):
    """Largest legal output-row tile whose VMEM working set fits `budget`.

    Accounts for the dominant consumers (with (8,128) layout padding): the
    double-buffered resident image block, double-buffered output blocks, the
    bf16 matmul rhs, the f32 matmul result and the chunked depthwise
    accumulator.  The output block needs th*wo % 128 == 0 or th == Ho.
    """
    fixed = 2 * ss * cin * _rup(hpp, 8) * _rup(wpp, 128) * 4     # 2x image block
    fixed += (cin * 9 + cin + cout) * 4 + _rup(cout, 16) * _rup(cin, 128) * 2

    def usage(t):
        lw = _rup(t * wo, 128)
        return (fixed
                + 2 * _rup(cout, 8) * lw * 4      # double-buffered output block
                + _rup(cin, 16) * lw * 2          # bf16 matmul rhs
                + 2 * _rup(cout, 8) * lw * 4      # matmul result + activated copy
                + (256 << 10))                    # chunked dw accumulator / bands

    divisors = [t for t in range(1, ho + 1) if ho % t == 0]
    lane_ok = [t for t in divisors if (t * wo) % 128 == 0] or [ho]
    fitting = [t for t in lane_ok if usage(t) <= budget] or [min(lane_ok)]
    tiled = [t for t in fitting if ho // t >= 2]  # >=2 tiles: overlap writeback
    return max(tiled) if tiled else max(fitting)


def conv2d_depthwise(x, params, *, stride=1, eps=1e-5,
                     mxu_dtype=jnp.bfloat16, out_dtype=None):
    """Forward pass of Conv2dDepthWise.  x: (B, Cin, H, W) float32 (NCHW)."""
    b, cin, h, w = x.shape
    s = int(stride)
    dw_w_t = params["dw_w"]                      # torch layout (Cin, 1, K, K)
    pw_w_t = params["pw_w"]                      # torch layout (Cout, Cin, 1, 1)
    k = dw_w_t.shape[-1]
    cout = pw_w_t.shape[0]
    pad = k // 2
    ho = (h + 2 * pad - k) // s + 1
    wo = (w + 2 * pad - k) // s + 1
    q = (k - 1) // s
    hpp, wpp = ho + q, wo + q
    out_dtype = out_dtype or x.dtype             # bf16 here halves write-back (v5e)

    # Fold eval-mode BN into the convolutions (scale -> weights, bias kept).
    dw_s, dw_bias = _fold_bn(params["dw_gamma"], params["dw_beta"],
                             params["dw_mean"], params["dw_var"], eps)
    pw_s, pw_bias = _fold_bn(params["pw_gamma"], params["pw_beta"],
                             params["pw_mean"], params["pw_var"], eps)
    dw_w = (dw_w_t[:, 0] * dw_s[:, None, None]).astype(jnp.float32)    # (Cin,K,K)
    pw_w = (pw_w_t[:, :, 0, 0] * pw_s[:, None]).astype(mxu_dtype)      # (Cout,Cin)
    dw_bias = dw_bias.reshape(cin, 1, 1).astype(jnp.float32)
    pw_bias = pw_bias.reshape(cout, 1).astype(jnp.float32)

    # Pad once in the wrapper (static path, jit-safe).  For stride > 1 also
    # de-interleave into stride^2 phase planes so every depthwise tap in the
    # kernel is a unit-stride slice (no lane-strided reads).
    xpad = jnp.pad(x, ((0, 0), (0, 0), (pad, pad), (pad, pad)))
    hp, wp = h + 2 * pad, w + 2 * pad
    if s == 1:
        xph = xpad                                              # (B,Cin,Hpp,Wpp)
    else:
        tgt_h, tgt_w = s * hpp, s * wpp          # exactly the rows/cols read
        xpad = xpad[:, :, :min(hp, tgt_h), :min(wp, tgt_w)]
        xpad = jnp.pad(xpad, ((0, 0), (0, 0),
                              (0, max(0, tgt_h - hp)), (0, max(0, tgt_w - wp))))
        xph = xpad.reshape(b, cin, hpp, s, wpp, s)
        xph = jnp.transpose(xph, (0, 3, 5, 1, 2, 4))            # (B,s,s,Cin,Hpp,Wpp)
        xph = xph.reshape(b, s * s * cin, hpp, wpp)
    ss = s * s

    cap = _vmem_capacity_bytes()                 # 64 MiB v7x / 128 MiB v5e,v6e
    vmem_limit = int(cap * 0.85)
    th = _pick_row_tile(ho, wo, cin, cout, ss, hpp, wpp, int(vmem_limit * 0.8))
    n_t = ho // th

    # Depthwise channel-chunk size: keep one chunk's f32 accumulator <= ~112 KiB
    # so all K*K taps hit it while it stays register/VMEM-hot.
    acc_bytes_per_ch = _rup(th, 8) * _rup(wo, 128) * 4
    cc = min(cin, max(1, (112 << 10) // acc_bytes_per_ch))
    if cc >= 8:
        cc = (cc // 8) * 8

    cost = pl.CostEstimate(
        flops=2 * b * ho * wo * cin * (k * k + cout),
        transcendentals=0,
        bytes_accessed=(xph.size * 4
                        + b * cout * ho * wo * jnp.dtype(out_dtype).itemsize
                        + dw_w.size * 4 + pw_w.size * 2 + (cin + cout) * 4))

    out_flat = pl.pallas_call(
        functools.partial(_dw_sep_kernel, stride=s, th=th, wo=wo, cc=cc),
        out_shape=jax.ShapeDtypeStruct((b, cout, ho * wo), out_dtype),
        grid=(b, n_t),
        in_specs=[
            # Same block for every row tile of one image -> the image is DMA'd
            # from HBM once per image (per core) and kept resident; no separate
            # padded VMEM scratch anymore.
            # TODO(synk): pipeline_mode=pl.Buffered(1) here would halve the
            # resident-image VMEM on v7x at the cost of image-prefetch overlap.
            pl.BlockSpec((None, ss * cin, hpp, wpp), lambda bi, ti: (bi, 0, 0, 0)),
            pl.BlockSpec((cin, k, k), lambda bi, ti: (0, 0, 0)),
            pl.BlockSpec((cin, 1, 1), lambda bi, ti: (0, 0, 0)),
            pl.BlockSpec((cout, cin), lambda bi, ti: (0, 0)),
            pl.BlockSpec((cout, 1), lambda bi, ti: (0, 0)),
        ],
        out_specs=pl.BlockSpec((None, cout, th * wo), lambda bi, ti: (bi, 0, ti)),
        compiler_params=pltpu.CompilerParams(
            # No cross-iteration state (no scratch, distinct output blocks), so
            # both axes are parallel -> B==1 calls can use both v7x TensorCores.
            dimension_semantics=("parallel", "parallel"),
            vmem_limit_bytes=vmem_limit),
        cost_estimate=cost,
    )(xph, dw_w, dw_bias, pw_w, pw_bias)

    # Free reshape back to NCHW (flattened layout is already row-major).
    return out_flat.reshape(b, cout, ho, wo)


def _reference(x_nchw, params, *, stride, eps=1e-5):
    """Pure-JAX reference (matches PyTorch eval-mode forward)."""
    dw_w = params["dw_w"]   # (Cin, 1, K, K)
    pw_w = params["pw_w"]   # (Cout, Cin, 1, 1)
    cin = x_nchw.shape[1]
    k = dw_w.shape[-1]
    pad = k // 2
    h = jax.lax.conv_general_dilated(
        x_nchw, dw_w, window_strides=(stride, stride),
        padding=((pad, pad), (pad, pad)),
        dimension_numbers=("NCHW", "OIHW", "NCHW"),
        feature_group_count=cin)
    s, b_ = _fold_bn(params["dw_gamma"], params["dw_beta"],
                     params["dw_mean"], params["dw_var"], eps)
    h = jnp.maximum(h * s[None, :, None, None] + b_[None, :, None, None], 0.0)
    y = jax.lax.conv_general_dilated(
        h, pw_w, window_strides=(1, 1), padding=((0, 0), (0, 0)),
        dimension_numbers=("NCHW", "OIHW", "NCHW"))
    s, b_ = _fold_bn(params["pw_gamma"], params["pw_beta"],
                     params["pw_mean"], params["pw_var"], eps)
    return jnp.maximum(y * s[None, :, None, None] + b_[None, :, None, None], 0.0)


if __name__ == "__main__":
    # Small shapes consistent with the module: B=2, Cin=4, Cout=8, 16x16, k=3.
    B, Cin, Cout, H, W, K = 2, 4, 8, 16, 16, 3

    key = jax.random.PRNGKey(0)
    ks = jax.random.split(key, 11)
    params = {
        "dw_w": 0.2 * jax.random.normal(ks[0], (Cin, 1, K, K), jnp.float32),
        "dw_gamma": 1.0 + 0.1 * jax.random.normal(ks[1], (Cin,), jnp.float32),
        "dw_beta": 0.1 * jax.random.normal(ks[2], (Cin,), jnp.float32),
        "dw_mean": 0.05 * jax.random.normal(ks[3], (Cin,), jnp.float32),
        "dw_var": 1.0 + 0.1 * jax.random.uniform(ks[4], (Cin,), jnp.float32),
        "pw_w": 0.2 * jax.random.normal(ks[5], (Cout, Cin, 1, 1), jnp.float32),
        "pw_gamma": 1.0 + 0.1 * jax.random.normal(ks[6], (Cout,), jnp.float32),
        "pw_beta": 0.1 * jax.random.normal(ks[7], (Cout,), jnp.float32),
        "pw_mean": 0.05 * jax.random.normal(ks[8], (Cout,), jnp.float32),
        "pw_var": 1.0 + 0.1 * jax.random.uniform(ks[9], (Cout,), jnp.float32),
    }
    # TODO(synk): BatchNorm is evaluated with fixed (running) statistics, i.e.
    # PyTorch .eval() semantics; train-mode batch statistics are not modeled.

    x = jax.random.normal(ks[10], (B, Cin, H, W), jnp.float32)

    # Exercise both the stride-1 path and the stride-2 phase-plane fast path
    # (MobileNet alternates stride-1 and stride-2 blocks).
    for stride in (1, 2):
        out = jax.block_until_ready(conv2d_depthwise(x, params, stride=stride))
        ref = _reference(x, params, stride=stride)
        ho = (H + 2 * (K // 2) - K) // stride + 1
        assert out.shape == ref.shape == (B, Cout, ho, ho)
        # The pointwise matmul uses bf16 MXU operands (f32 accumulation), so the
        # comparison tolerance vs the all-f32 reference is relaxed accordingly.
        assert jnp.allclose(out, ref, atol=3e-2, rtol=3e-2), \
            f"mismatch vs reference (stride={stride})"

    print("KERNEL_OK")
</pallas_src>

<mosaic_0001>
module attributes {stable_mosaic.version = 11 : i64} {
  func.func @_dw_sep_kernel(%arg0: i32, %arg1: i32, %arg2: memref<1x4x18x18xf32, #tpu.memory_space<vmem>>, %arg3: memref<4x3x3xf32, #tpu.memory_space<vmem>>, %arg4: memref<4x1x1xf32, #tpu.memory_space<vmem>>, %arg5: memref<8x4xbf16, #tpu.memory_space<vmem>>, %arg6: memref<8x1xf32, #tpu.memory_space<vmem>>, %arg7: memref<1x8x128xf32, #tpu.memory_space<vmem>>) attributes {dimension_semantics = [#tpu.dimension_semantics<parallel>, #tpu.dimension_semantics<parallel>], iteration_bounds = array<i64: 2, 2>, scalar_prefetch = 0 : i64, scratch_operands = 0 : i64, tpu.core_type = #tpu.core_type<tc>, window_params = [{transform_indices = @transform_0, window_bounds = array<i64: 1, 4, 18, 18>}, {pipeline_mode = #tpu.pipeline_mode<synchronous>, transform_indices = @transform_1, window_bounds = array<i64: 4, 3, 3>}, {pipeline_mode = #tpu.pipeline_mode<synchronous>, transform_indices = @transform_2, window_bounds = array<i64: 4, 1, 1>}, {pipeline_mode = #tpu.pipeline_mode<synchronous>, transform_indices = @transform_3, window_bounds = array<i64: 8, 4>}, {pipeline_mode = #tpu.pipeline_mode<synchronous>, transform_indices = @transform_4, window_bounds = array<i64: 8, 1>}, {transform_indices = @transform_5, window_bounds = array<i64: 1, 8, 128>}]} {
    %c8_i32 = arith.constant 8 : i32
    %0 = arith.muli %arg1, %c8_i32 : i32
    %1 = tpu.assume_multiple %0, 8 : i32
    %c0 = arith.constant 0 : index
    %c0_0 = arith.constant 0 : index
    %c0_1 = arith.constant 0 : index
    %2 = vector.load %arg3[%c0, %c0_0, %c0_1] : memref<4x3x3xf32, #tpu.memory_space<vmem>>, vector<4x3x3xf32>
    %c0_2 = arith.constant 0 : index
    %c0_3 = arith.constant 0 : index
    %c0_4 = arith.constant 0 : index
    %3 = vector.load %arg4[%c0_2, %c0_3, %c0_4] : memref<4x1x1xf32, #tpu.memory_space<vmem>>, vector<4x1x1xf32>
    %4 = vector.extract_strided_slice %2 {offsets = [0, 0, 0], sizes = [4, 1, 1], strides = [1, 1, 1]} : vector<4x3x3xf32> to vector<4x1x1xf32>
    %5 = vector.extract_strided_slice %2 {offsets = [0, 0, 1], sizes = [4, 1, 1], strides = [1, 1, 1]} : vector<4x3x3xf32> to vector<4x1x1xf32>
    %6 = vector.extract_strided_slice %2 {offsets = [0, 0, 2], sizes = [4, 1, 1], strides = [1, 1, 1]} : vector<4x3x3xf32> to vector<4x1x1xf32>
    %7 = vector.extract_strided_slice %2 {offsets = [0, 1, 0], sizes = [4, 1, 1], strides = [1, 1, 1]} : vector<4x3x3xf32> to vector<4x1x1xf32>
    %8 = vector.extract_strided_slice %2 {offsets = [0, 1, 1], sizes = [4, 1, 1], strides = [1, 1, 1]} : vector<4x3x3xf32> to vector<4x1x1xf32>
    %9 = vector.extract_strided_slice %2 {offsets = [0, 1, 2], sizes = [4, 1, 1], strides = [1, 1, 1]} : vector<4x3x3xf32> to vector<4x1x1xf32>
    %10 = vector.extract_strided_slice %2 {offsets = [0, 2, 0], sizes = [4, 1, 1], strides = [1, 1, 1]} : vector<4x3x3xf32> to vector<4x1x1xf32>
    %11 = vector.extract_strided_slice %2 {offsets = [0, 2, 1], sizes = [4, 1, 1], strides = [1, 1, 1]} : vector<4x3x3xf32> to vector<4x1x1xf32>
    %12 = vector.extract_strided_slice %2 {offsets = [0, 2, 2], sizes = [4, 1, 1], strides = [1, 1, 1]} : vector<4x3x3xf32> to vector<4x1x1xf32>
    %cst = arith.constant 0.000000e+00 : f32
    %13 = vector.broadcast %cst : f32 to vector<4x8x16xf32>
    %c0_i32 = arith.constant 0 : i32
    %14 = arith.addi %1, %c0_i32 : i32
    %c0_5 = arith.constant 0 : index
    %c0_6 = arith.constant 0 : index
    %15 = arith.index_cast %14 : i32 to index
    %c0_7 = arith.constant 0 : index
    %16 = vector.load %arg2[%c0_5, %c0_6, %15, %c0_7] : memref<1x4x18x18xf32, #tpu.memory_space<vmem>>, vector<1x4x8x18xf32>
    %17 = vector.shape_cast %16 : vector<1x4x8x18xf32> to vector<4x8x18xf32>
    %18 = vector.extract_strided_slice %17 {offsets = [0, 0, 0], sizes = [4, 8, 16], strides = [1, 1, 1]} : vector<4x8x18xf32> to vector<4x8x16xf32>
    %19 = vector.broadcast %4 : vector<4x1x1xf32> to vector<4x8x16xf32>
    %20 = arith.mulf %18, %19 : vector<4x8x16xf32>
    %21 = arith.addf %13, %20 : vector<4x8x16xf32>
    %22 = vector.extract_strided_slice %17 {offsets = [0, 0, 1], sizes = [4, 8, 16], strides = [1, 1, 1]} : vector<4x8x18xf32> to vector<4x8x16xf32>
    %23 = vector.broadcast %5 : vector<4x1x1xf32> to vector<4x8x16xf32>
    %24 = arith.mulf %22, %23 : vector<4x8x16xf32>
    %25 = arith.addf %21, %24 : vector<4x8x16xf32>
    %26 = vector.extract_strided_slice %17 {offsets = [0, 0, 2], sizes = [4, 8, 16], strides = [1, 1, 1]} : vector<4x8x18xf32> to vector<4x8x16xf32>
    %27 = vector.broadcast %6 : vector<4x1x1xf32> to vector<4x8x16xf32>
    %28 = arith.mulf %26, %27 : vector<4x8x16xf32>
    %29 = arith.addf %25, %28 : vector<4x8x16xf32>
    %c1_i32 = arith.constant 1 : i32
    %30 = arith.addi %1, %c1_i32 : i32
    %c0_8 = arith.constant 0 : index
    %c0_9 = arith.constant 0 : index
    %31 = arith.index_cast %30 : i32 to index
    %c0_10 = arith.constant 0 : index
    %32 = vector.load %arg2[%c0_8, %c0_9, %31, %c0_10] : memref<1x4x18x18xf32, #tpu.memory_space<vmem>>, vector<1x4x8x18xf32>
    %33 = vector.shape_cast %32 : vector<1x4x8x18xf32> to vector<4x8x18xf32>
    %34 = vector.extract_strided_slice %33 {offsets = [0, 0, 0], sizes = [4, 8, 16], strides = [1, 1, 1]} : vector<4x8x18xf32> to vector<4x8x16xf32>
    %35 = vector.broadcast %7 : vector<4x1x1xf32> to vector<4x8x16xf32>
    %36 = arith.mulf %34, %35 : vector<4x8x16xf32>
    %37 = arith.addf %29, %36 : vector<4x8x16xf32>
    %38 = vector.extract_strided_slice %33 {offsets = [0, 0, 1], sizes = [4, 8, 16], strides = [1, 1, 1]} : vector<4x8x18xf32> to vector<4x8x16xf32>
    %39 = vector.broadcast %8 : vector<4x1x1xf32> to vector<4x8x16xf32>
    %40 = arith.mulf %38, %39 : vector<4x8x16xf32>
    %41 = arith.addf %37, %40 : vector<4x8x16xf32>
    %42 = vector.extract_strided_slice %33 {offsets = [0, 0, 2], sizes = [4, 8, 16], strides = [1, 1, 1]} : vector<4x8x18xf32> to vector<4x8x16xf32>
    %43 = vector.broadcast %9 : vector<4x1x1xf32> to vector<4x8x16xf32>
    %44 = arith.mulf %42, %43 : vector<4x8x16xf32>
    %45 = arith.addf %41, %44 : vector<4x8x16xf32>
    %c2_i32 = arith.constant 2 : i32
    %46 = arith.addi %1, %c2_i32 : i32
    %c0_11 = arith.constant 0 : index
    %c0_12 = arith.constant 0 : index
    %47 = arith.index_cast %46 : i32 to index
    %c0_13 = arith.constant 0 : index
    %48 = vector.load %arg2[%c0_11, %c0_12, %47, %c0_13] : memref<1x4x18x18xf32, #tpu.memory_space<vmem>>, vector<1x4x8x18xf32>
    %49 = vector.shape_cast %48 : vector<1x4x8x18xf32> to vector<4x8x18xf32>
    %50 = vector.extract_strided_slice %49 {offsets = [0, 0, 0], sizes = [4, 8, 16], strides = [1, 1, 1]} : vector<4x8x18xf32> to vector<4x8x16xf32>
    %51 = vector.broadcast %10 : vector<4x1x1xf32> to vector<4x8x16xf32>
    %52 = arith.mulf %50, %51 : vector<4x8x16xf32>
    %53 = arith.addf %45, %52 : vector<4x8x16xf32>
    %54 = vector.extract_strided_slice %49 {offsets = [0, 0, 1], sizes = [4, 8, 16], strides = [1, 1, 1]} : vector<4x8x18xf32> to vector<4x8x16xf32>
    %55 = vector.broadcast %11 : vector<4x1x1xf32> to vector<4x8x16xf32>
    %56 = arith.mulf %54, %55 : vector<4x8x16xf32>
    %57 = arith.addf %53, %56 : vector<4x8x16xf32>
    %58 = vector.extract_strided_slice %49 {offsets = [0, 0, 2], sizes = [4, 8, 16], strides = [1, 1, 1]} : vector<4x8x18xf32> to vector<4x8x16xf32>
    %59 = vector.broadcast %12 : vector<4x1x1xf32> to vector<4x8x16xf32>
    %60 = arith.mulf %58, %59 : vector<4x8x16xf32>
    %61 = arith.addf %57, %60 : vector<4x8x16xf32>
    %62 = vector.broadcast %3 : vector<4x1x1xf32> to vector<4x8x16xf32>
    %63 = arith.addf %61, %62 : vector<4x8x16xf32>
    %cst_14 = arith.constant 0.000000e+00 : f32
    %64 = vector.broadcast %cst_14 : f32 to vector<4x8x16xf32>
    %65 = arith.maximumf %63, %64 : vector<4x8x16xf32>
    %66 = vector.shape_cast %65 : vector<4x8x16xf32> to vector<4x128xf32>
    %67 = arith.truncf %66 : vector<4x128xf32> to vector<4x128xbf16>
    %c0_15 = arith.constant 0 : index
    %c0_16 = arith.constant 0 : index
    %68 = vector.load %arg5[%c0_15, %c0_16] : memref<8x4xbf16, #tpu.memory_space<vmem>>, vector<8x4xbf16>
    %cst_17 = arith.constant dense<0.000000e+00> : vector<8x128xf32>
    %69 = tpu.matmul %68, %67, %cst_17 {dimension_numbers = #tpu.dot_dimension_numbers<[1], [0], [0], [1], [0, 0, 1, 1], [], []>} : vector<8x4xbf16>, vector<4x128xbf16>, vector<8x128xf32> -> vector<8x128xf32>
    %c0_18 = arith.constant 0 : index
    %c0_19 = arith.constant 0 : index
    %70 = vector.load %arg6[%c0_18, %c0_19] : memref<8x1xf32, #tpu.memory_space<vmem>>, vector<8x1xf32>
    %71 = vector.broadcast %70 : vector<8x1xf32> to vector<8x128xf32>
    %72 = arith.addf %69, %71 : vector<8x128xf32>
    %cst_20 = arith.constant 0.000000e+00 : f32
    %73 = vector.broadcast %cst_20 : f32 to vector<8x128xf32>
    %74 = arith.maximumf %72, %73 : vector<8x128xf32>
    %c0_21 = arith.constant 0 : index
    %c0_22 = arith.constant 0 : index
    %c0_23 = arith.constant 0 : index
    %75 = vector.load %arg7[%c0_21, %c0_22, %c0_23] : memref<1x8x128xf32, #tpu.memory_space<vmem>>, vector<1x8x128xf32>
    %76 = vector.shape_cast %75 : vector<1x8x128xf32> to vector<8x128xf32>
    %77 = vector.shape_cast %74 : vector<8x128xf32> to vector<1x8x128xf32>
    tpu.vector_store %arg7[%c0_21, %c0_22, %c0_23], %77 {strides = array<i32>} : memref<1x8x128xf32, #tpu.memory_space<vmem>>, vector<1x8x128xf32>,
    return
  }
  func.func @transform_0(%arg0: i32, %arg1: i32) -> (i32, i32, i32, i32) {
    %c0_i32 = arith.constant 0 : i32
    %c0_i32_0 = arith.constant 0 : i32
    %c0_i32_1 = arith.constant 0 : i32
    %c0_i32_2 = arith.constant 0 : i32
    return %arg0, %c0_i32, %c0_i32_0, %c0_i32_1 : i32, i32, i32, i32
  }
  func.func @transform_1(%arg0: i32, %arg1: i32) -> (i32, i32, i32) {
    %c0_i32 = arith.constant 0 : i32
    %c0_i32_0 = arith.constant 0 : i32
    %c0_i32_1 = arith.constant 0 : i32
    %c0_i32_2 = arith.constant 0 : i32
    return %c0_i32, %c0_i32_0, %c0_i32_1 : i32, i32, i32
  }
  func.func @transform_2(%arg0: i32, %arg1: i32) -> (i32, i32, i32) {
    %c0_i32 = arith.constant 0 : i32
    %c0_i32_0 = arith.constant 0 : i32
    %c0_i32_1 = arith.constant 0 : i32
    %c0_i32_2 = arith.constant 0 : i32
    return %c0_i32, %c0_i32_0, %c0_i32_1 : i32, i32, i32
  }
  func.func @transform_3(%arg0: i32, %arg1: i32) -> (i32, i32) {
    %c0_i32 = arith.constant 0 : i32
    %c0_i32_0 = arith.constant 0 : i32
    %c0_i32_1 = arith.constant 0 : i32
    return %c0_i32, %c0_i32_0 : i32, i32
  }
  func.func @transform_4(%arg0: i32, %arg1: i32) -> (i32, i32) {
    %c0_i32 = arith.constant 0 : i32
    %c0_i32_0 = arith.constant 0 : i32
    %c0_i32_1 = arith.constant 0 : i32
    return %c0_i32, %c0_i32_0 : i32, i32
  }
  func.func @transform_5(%arg0: i32, %arg1: i32) -> (i32, i32, i32) {
    %c0_i32 = arith.constant 0 : i32
    %c0_i32_0 = arith.constant 0 : i32
    return %arg0, %c0_i32, %arg1 : i32, i32, i32
  }
}

</mosaic_0001>

<llo_original>
// kernel: tpu_custom_call.1
$region0: #{tpu_custom_call.1}
  #allocation0 [shape = 'u32[]', space=smem, size = 0x4, offset = 0x4, fixed_abs, tag = 'smem constant byte address 0x4 - core index']
  #allocation1 [shape = 'u32[144,128]{1,0:T(1,128)}', space=vmem, size = 0x12000, scoped, tag = 'internal scratch']
  %s0 = inlined_call_operand.vmem [shape: f32[2,4,18,18], index: 0, kind: input, shape index: {}]
  %s1 = inlined_call_operand.vmem [shape: f32[4,3,3], index: 1, kind: input, shape index: {}]
  %s2 = inlined_call_operand.vmem [shape: f32[4,1,1], index: 2, kind: input, shape index: {}]
  %s3 = inlined_call_operand.vmem [shape: bf16[8,4], index: 3, kind: input, shape index: {}]
  %s4 = inlined_call_operand.vmem [shape: f32[8,1], index: 4, kind: input, shape index: {}]
  %s5 = inlined_call_operand.hbm [shape: f32[2,8,256], index: 5, kind: output, shape index: {}]
  %s6 = sld [smem:[#allocation0]]
  $region53: #{tpu_custom_call.1} parent=0
    _
  %s8 = ssub.s32 1, %s6
  %s9 = scalar_select 0, %s8, %s6
  $region1: #{tpu_custom_call.1} parent=0
    #allocation2 [shape = 'u8[8192]{0}', space=vmem, size = 0x2000, scoped, tag = 'output window, operand 0']
    #allocation3 [shape = 's32[2]{0}', space=sflag, size = 0x8, scoped, tag = 'scoped memory for tpu_custom_call.1']
    %10 = vsyncpa [#allocation3], 0
    %s11 = scalar_lea.sflag [#allocation3], 1
    %12 = vsyncpa %s11, 0
    loop: start=0, step=1, limit=6
    $region2: #{tpu_custom_call.1} parent=1 // loop_pre_header
      _
    $region3: #{tpu_custom_call.1} parent=1 // loop_header
      %s14 = sphi 0, %s18
      %p15 = scmp.ge.s32.totalorder %s14, 6
      %s21 = sphi 0, %s33
      %s22 = sphi 0, %s29
      %s23 = sphi 0, %s21
      %s24 = sphi 0, %s22
      %s25 = sphi 0, %s23
      %s26 = sphi 0, %s24
      %s36 = sphi 0, %s38
      %s39 = sphi 0, %s36
      %s40 = sphi 0, %s39
      %s56 = sphi 0, %s40
      %s60 = sphi 0, %s60
      %s62 = sphi 0, %s60
      %s63 = sphi 0, %s62
      %s77 = sphi 0, %s63
      %s81 = sphi 0, %s81
      %s83 = sphi 0, %s81
      %s84 = sphi 0, %s83
      %s98 = sphi 0, %s84
      %s102 = sphi 0, %s102
      %s104 = sphi 0, %s102
      %s105 = sphi 0, %s104
      %s119 = sphi 0, %s105
      %s123 = sphi 0, %s123
      %s125 = sphi 0, %s123
      %s126 = sphi 0, %s125
      %s140 = sphi 0, %s126
      %s148 = sphi 0, %s150
      %s151 = sphi 0, %s148
      %s152 = sphi 0, %s151
      %s168 = sphi 0, %s152
    $region4: #{tpu_custom_call.1} parent=1 // loop_header_branch
      %17 = sbr.rel (%p15) target = $region8
    $region5: #{tpu_custom_call.1} parent=1 // loop_body
      %s19 = ssub.s32 %s14, 1
      %s20 = ssub.s32 %s14, 2
      %s27 = sadd.s32 1, %s22
      %p28 = scmp.ge.s32.totalorder %s27, 2
      %s29 = scalar_select %p28, 0, %s27
      %s30 = sadd.s32 1, %s21
      %s31 = scalar_select %p28, %s30, %s21
      %p32 = scmp.ge.s32.totalorder %s31, 2
      %s33 = scalar_select %p32, 0, %s31
      %s34 = ssub.s32 %s21, %s33
      %p35 = scmp.eq.s32.totalorder %s34, 0
      %s37 = sadd.s32 %s36, 1
      %s38 = scalar_select %p35, %s36, %s37
      %p41 = pneg %p35
      %p42 = scmp.eq.s32.totalorder %s14, 3
      %p43 = por %p41, %p42
      %p44 = scmp.ne.s32.totalorder %s36, %s39
      %p45 = scmp.eq.s32.totalorder %s14, 0
      %p46 = por %p44, %p45
      %p47 = scmp.ne.s32.totalorder %s36, %s39
      %p48 = scmp.eq.s32.totalorder %s19, 3
      %p49 = por %p47, %p48
      %p50 = scmp.ne.s32.totalorder %s39, %s40
      %p51 = scmp.eq.s32.totalorder %s19, 0
      %p52 = por %p50, %p51
      %p53 = scmp.ne.s32.totalorder %s39, %s40
      %p54 = scmp.eq.s32.totalorder %s20, 3
      %p55 = por %p53, %p54
      %p57 = scmp.ne.s32.totalorder %s40, %s56
      %p58 = scmp.eq.s32.totalorder %s20, 0
      %p59 = por %p57, %p58
      %s61 = sadd.s32 %s60, 1
      %p64 = scmp.eq.s32.totalorder %s14, 3
      %p65 = scmp.ne.s32.totalorder %s60, %s62
      %p66 = scmp.eq.s32.totalorder %s14, 0
      %p67 = por %p65, %p66
      %p68 = scmp.ne.s32.totalorder %s60, %s62
      %p69 = scmp.eq.s32.totalorder %s19, 3
      %p70 = por %p68, %p69
      %p71 = scmp.ne.s32.totalorder %s62, %s63
      %p72 = scmp.eq.s32.totalorder %s19, 0
      %p73 = por %p71, %p72
      %p74 = scmp.ne.s32.totalorder %s62, %s63
      %p75 = scmp.eq.s32.totalorder %s20, 3
      %p76 = por %p74, %p75
      %p78 = scmp.ne.s32.totalorder %s63, %s77
      %p79 = scmp.eq.s32.totalorder %s20, 0
      %p80 = por %p78, %p79
      %s82 = sadd.s32 %s81, 1
      %p85 = scmp.eq.s32.totalorder %s14, 3
      %p86 = scmp.ne.s32.totalorder %s81, %s83
      %p87 = scmp.eq.s32.totalorder %s14, 0
      %p88 = por %p86, %p87
      %p89 = scmp.ne.s32.totalorder %s81, %s83
      %p90 = scmp.eq.s32.totalorder %s19, 3
      %p91 = por %p89, %p90
      %p92 = scmp.ne.s32.totalorder %s83, %s84
      %p93 = scmp.eq.s32.totalorder %s19, 0
      %p94 = por %p92, %p93
      %p95 = scmp.ne.s32.totalorder %s83, %s84
      %p96 = scmp.eq.s32.totalorder %s20, 3
      %p97 = por %p95, %p96
      %p99 = scmp.ne.s32.totalorder %s84, %s98
      %p100 = scmp.eq.s32.totalorder %s20, 0
      %p101 = por %p99, %p100
      %s103 = sadd.s32 %s102, 1
      %p106 = scmp.eq.s32.totalorder %s14, 3
      %p107 = scmp.ne.s32.totalorder %s102, %s104
      %p108 = scmp.eq.s32.totalorder %s14, 0
      %p109 = por %p107, %p108
      %p110 = scmp.ne.s32.totalorder %s102, %s104
      %p111 = scmp.eq.s32.totalorder %s19, 3
      %p112 = por %p110, %p111
      %p113 = scmp.ne.s32.totalorder %s104, %s105
      %p114 = scmp.eq.s32.totalorder %s19, 0
      %p115 = por %p113, %p114
      %p116 = scmp.ne.s32.totalorder %s104, %s105
      %p117 = scmp.eq.s32.totalorder %s20, 3
      %p118 = por %p116, %p117
      %p120 = scmp.ne.s32.totalorder %s105, %s119
      %p121 = scmp.eq.s32.totalorder %s20, 0
      %p122 = por %p120, %p121
      %s124 = sadd.s32 %s123, 1
      %p127 = scmp.eq.s32.totalorder %s14, 3
      %p128 = scmp.ne.s32.totalorder %s123, %s125
      %p129 = scmp.eq.s32.totalorder %s14, 0
      %p130 = por %p128, %p129
      %p131 = scmp.ne.s32.totalorder %s123, %s125
      %p132 = scmp.eq.s32.totalorder %s19, 3
      %p133 = por %p131, %p132
      %p134 = scmp.ne.s32.totalorder %s125, %s126
      %p135 = scmp.eq.s32.totalorder %s19, 0
      %p136 = por %p134, %p135
      %p137 = scmp.ne.s32.totalorder %s125, %s126
      %p138 = scmp.eq.s32.totalorder %s20, 3
      %p139 = por %p137, %p138
      %p141 = scmp.ne.s32.totalorder %s126, %s140
      %p142 = scmp.eq.s32.totalorder %s20, 0
      %p143 = por %p141, %p142
      %s144 = ssub.s32 %s21, %s33
      %s145 = ssub.s32 %s22, %s29
      %s146 = sor.u32 %s144, %s145
      %p147 = scmp.eq.s32.totalorder %s146, 0
      %s149 = sadd.s32 %s148, 1
      %s150 = scalar_select %p147, %s148, %s149
      %p153 = pneg %p147
      %p154 = scmp.eq.s32.totalorder %s14, 3
      %p155 = por %p153, %p154
      %p156 = scmp.ne.s32.totalorder %s148, %s151
      %p157 = scmp.eq.s32.totalorder %s14, 0
      %p158 = por %p156, %p157
      %p159 = scmp.ne.s32.totalorder %s148, %s151
      %p160 = scmp.eq.s32.totalorder %s19, 3
      %p161 = por %p159, %p160
      %p162 = scmp.ne.s32.totalorder %s151, %s152
      %p163 = scmp.eq.s32.totalorder %s19, 0
      %p164 = por %p162, %p163
      %p165 = scmp.ne.s32.totalorder %s151, %s152
      %p166 = scmp.eq.s32.totalorder %s20, 3
      %p167 = por %p165, %p166
      %p169 = scmp.ne.s32.totalorder %s152, %s168
      %p170 = scmp.eq.s32.totalorder %s20, 0
      %p171 = por %p169, %p170
      %p172 = scmp.le.s32.totalorder 1, %s14
      %p173 = scmp.lt.s32.totalorder %s14, 5
      %p174 = pnand %p172, %p173
      %p175 = pneg %p174
      // Predicated region
      $region9: #{tpu_custom_call.1} parent=5 // pred_check
        _
      $region10: #{tpu_custom_call.1} parent=5 // pred_check_branch
        %177 = sbr.rel (%p174) target = $region12
      $region11: #{tpu_custom_call.1} parent=5 // pred_region
        %s178 = ssub.s32 %s14, 1
        // Predicated region
        $region13: #{tpu_custom_call.1} parent=11 // pred_check
          %p179 = pneg %p73
        $region14: #{tpu_custom_call.1} parent=11 // pred_check_branch
          %181 = sbr.rel (%p179) target = $region16
        $region15: #{tpu_custom_call.1} parent=11 // pred_region
          _
        $region16: #{tpu_custom_call.1} parent=11 // pred_fallthru
          _
        // Predicated region
        $region17: #{tpu_custom_call.1} parent=11 // pred_check
          %p182 = pneg %p94
        $region18: #{tpu_custom_call.1} parent=11 // pred_check_branch
          %184 = sbr.rel (%p182) target = $region20
        $region19: #{tpu_custom_call.1} parent=11 // pred_region
          _
        $region20: #{tpu_custom_call.1} parent=11 // pred_fallthru
          _
        // Predicated region
        $region21: #{tpu_custom_call.1} parent=11 // pred_check
          %p185 = pneg %p115
        $region22: #{tpu_custom_call.1} parent=11 // pred_check_branch
          %187 = sbr.rel (%p185) target = $region24
        $region23: #{tpu_custom_call.1} parent=11 // pred_region
          _
        $region24: #{tpu_custom_call.1} parent=11 // pred_fallthru
          _
        // Predicated region
        $region25: #{tpu_custom_call.1} parent=11 // pred_check
          %p188 = pneg %p136
        $region26: #{tpu_custom_call.1} parent=11 // pred_check_branch
          %190 = sbr.rel (%p188) target = $region28
        $region27: #{tpu_custom_call.1} parent=11 // pred_region
          _
        $region28: #{tpu_custom_call.1} parent=11 // pred_fallthru
          _
      $region12: #{tpu_custom_call.1} parent=5 // pred_fallthru
        _
      %p191 = scmp.lt.s32.totalorder %s14, 4
      // Predicated region
      $region29: #{tpu_custom_call.1} parent=5 // pred_check
        %p192 = pneg %p191
      $region30: #{tpu_custom_call.1} parent=5 // pred_check_branch
        %194 = sbr.rel (%p192) target = $region32
      $region31: #{tpu_custom_call.1} parent=5 // pred_region
        // Predicated region
        $region33: #{tpu_custom_call.1} parent=31 // pred_check
          %p195 = pneg %p46
        $region34: #{tpu_custom_call.1} parent=31 // pred_check_branch
          %197 = sbr.rel (%p195) target = $region36
        $region35: #{tpu_custom_call.1} parent=31 // pred_region
          %p198 = scmp.lt.s32.totalorder %s21, 1
          %s199 = scalar_select %p198, %s21, 1
          %s200 = smul.addr %s199, 12
          %s201 = smul.addr %s200, 8
          %s202 = scalar_lea.vmem %s0, %s201
        $region36: #{tpu_custom_call.1} parent=31 // pred_fallthru
          _
      $region32: #{tpu_custom_call.1} parent=5 // pred_fallthru
        _
      %p203 = scmp.le.s32.totalorder 1, %s14
      %p204 = scmp.lt.s32.totalorder %s14, 5
      %p205 = pnand %p203, %p204
      %p206 = pneg %p205
      // Predicated region
      $region37: #{tpu_custom_call.1} parent=5 // pred_check
        _
      $region38: #{tpu_custom_call.1} parent=5 // pred_check_branch
        %208 = sbr.rel (%p205) target = $region40
      $region39: #{tpu_custom_call.1} parent=5 // pred_region
        %s209 = ssub.s32 %s14, 1
        %p210 = scmp.lt.s32.totalorder %s23, 1
        %s211 = scalar_select %p210, %s23, 1
        %s212 = smul.addr %s211, 12
        %s213 = smul.addr %s212, 8
        %s214 = scalar_lea.vmem %s0, %s213
        %p215 = pneg %p52
        %p216 = pneg %p49
        %p217 = pneg %p73
        %p218 = pneg %p70
        %p219 = pneg %p94
        %p220 = pneg %p91
        %p221 = pneg %p115
        %p222 = pneg %p112
        %p223 = pneg %p136
        %p224 = pneg %p133
        %p225 = pneg %p164
        %p226 = pneg %p161
        %s227 = sand.u32 %s151, 1
        %s228 = scalar_lea.sflag [#allocation3], %s227
        %s229 = sand.u32 %s151, 1
        %s230 = smul.addr %s229, 8
        %s231 = scalar_lea.vmem [#allocation2], %s230
        %p232 = scmp.lt.s32.totalorder %s23, 1
        %s233 = scalar_select %p232, %s23, 1
        %s234 = smul.addr %s233, 12
        %s235 = smul.addr %s234, 8
        %s236 = scalar_lea.vmem %s0, %s235
        %s238 = smul.u32 %s24, 8
        %v239 = vld [vmem:[%s1] sm:$0x7]
        %v240 = vld [vmem:[%s1 + $0x4] sm:$0x7]
        %v241 = vld [vmem:[%s1 + $0x8] sm:$0x7]
        %v242 = vld [vmem:[%s1 + $0xc] sm:$0x7]
        %v243 = vld [vmem:[%s2] sm:$0x1]
        %v244 = vld [vmem:[%s2 + $0x1] sm:$0x1]
        %v245 = vld [vmem:[%s2 + $0x2] sm:$0x1]
        %v246 = vld [vmem:[%s2 + $0x3] sm:$0x1]
        %s247 = scalar_lea.vmem %s236, %s238
        %v248 = vld [vmem:[%s247] sm:$0xff]
        %v249 = vld [vmem:[%s247 + $0x18] sm:$0xff]
        %v250 = vld [vmem:[%s247 + $0x30] sm:$0xff]
        %v251 = vld [vmem:[%s247 + $0x48] sm:$0xff]
        %s253 = vtos %v239
        %v254 = vstv %s253
        %s257 = vtos %v240
        %v258 = vstv %s257
        %s261 = vtos %v241
        %v262 = vstv %s261
        %s265 = vtos %v242
        %v266 = vstv %s265
        %v268 = vmul.f32 %v248, %v254
        %v269 = vmul.f32 %v249, %v258
        %v270 = vmul.f32 %v250, %v262
        %v271 = vmul.f32 %v251, %v266
        %v272 = vadd.f32 %v268, 0.0
        %v273 = vadd.f32 %v269, 0.0
        %v274 = vadd.f32 %v270, 0.0
        %v275 = vadd.f32 %v271, 0.0
        %276 = vrot.lane.b32.xlu0 %v239, 127
        %v277 = vpop.permute.xlu0 %276
        %278 = vrot.lane.b32.xlu0 %v240, 127
        %v279 = vpop.permute.xlu0 %278
        %280 = vrot.lane.b32.xlu0 %v241, 127
        %v281 = vpop.permute.xlu0 %280
        %282 = vrot.lane.b32.xlu0 %v242, 127
        %v283 = vpop.permute.xlu0 %282
        %s284 = vtos %v277
        %v285 = vstv %s284
        %s287 = vtos %v279
        %v288 = vstv %s287
        %s290 = vtos %v281
        %v291 = vstv %s290
        %s293 = vtos %v283
        %v294 = vstv %s293
        %v296 = vmul.f32 %v248, %v285
        %v297 = vmul.f32 %v249, %v288
        %v298 = vmul.f32 %v250, %v291
        %v299 = vmul.f32 %v251, %v294
        %304 = vrot.lane.b32.xlu0 %v296, 127
        %v305 = vpop.permute.xlu0 %304
        %306 = vrot.lane.b32.xlu0 %v297, 127
        %v307 = vpop.permute.xlu0 %306
        %308 = vrot.lane.b32.xlu0 %v298, 127
        %v309 = vpop.permute.xlu0 %308
        %310 = vrot.lane.b32.xlu0 %v299, 127
        %v311 = vpop.permute.xlu0 %310
        %v316 = vadd.f32 %v272, %v305
        %v317 = vadd.f32 %v273, %v307
        %v318 = vadd.f32 %v274, %v309
        %v319 = vadd.f32 %v275, %v311
        %320 = vrot.lane.b32.xlu0 %v239, 126
        %v321 = vpop.permute.xlu0 %320
        %322 = vrot.lane.b32.xlu0 %v240, 126
        %v323 = vpop.permute.xlu0 %322
        %324 = vrot.lane.b32.xlu0 %v241, 126
        %v325 = vpop.permute.xlu0 %324
        %326 = vrot.lane.b32.xlu0 %v242, 126
        %v327 = vpop.permute.xlu0 %326
        %s328 = vtos %v321
        %v329 = vstv %s328
        %s331 = vtos %v323
        %v332 = vstv %s331
        %s334 = vtos %v325
        %v335 = vstv %s334
        %s337 = vtos %v327
        %v338 = vstv %s337
        %v340 = vmul.f32 %v248, %v329
        %v341 = vmul.f32 %v249, %v332
        %v342 = vmul.f32 %v250, %v335
        %v343 = vmul.f32 %v251, %v338
        %348 = vrot.lane.b32.xlu0 %v340, 126
        %v349 = vpop.permute.xlu0 %348
        %350 = vrot.lane.b32.xlu0 %v341, 126
        %v351 = vpop.permute.xlu0 %350
        %352 = vrot.lane.b32.xlu0 %v342, 126
        %v353 = vpop.permute.xlu0 %352
        %354 = vrot.lane.b32.xlu0 %v343, 126
        %v355 = vpop.permute.xlu0 %354
        %v360 = vadd.f32 %v316, %v349
        %v361 = vadd.f32 %v317, %v351
        %v362 = vadd.f32 %v318, %v353
        %v363 = vadd.f32 %v319, %v355
        %s364 = sadd.s32 %s238, 1
        %s365 = scalar_lea.vmem %s236, %s364
        %v366 = vld [vmem:[%s365] sm:$0xff]
        %v367 = vld [vmem:[%s365 + $0x18] sm:$0xff]
        %v368 = vld [vmem:[%s365 + $0x30] sm:$0xff]
        %v369 = vld [vmem:[%s365 + $0x48] sm:$0xff]
        %v370 = vrot.slane %v239, 1
        %v371 = vrot.slane %v240, 1
        %v372 = vrot.slane %v241, 1
        %v373 = vrot.slane %v242, 1
        %s374 = vtos %v370
        %v375 = vstv %s374
        %s377 = vtos %v371
        %v378 = vstv %s377
        %s380 = vtos %v372
        %v381 = vstv %s380
        %s383 = vtos %v373
        %v384 = vstv %s383
        %v386 = vmul.f32 %v366, %v375
        %v387 = vmul.f32 %v367, %v378
        %v388 = vmul.f32 %v368, %v381
        %v389 = vmul.f32 %v369, %v384
        %v390 = vadd.f32 %v360, %v386
        %v391 = vadd.f32 %v361, %v387
        %v392 = vadd.f32 %v362, %v388
        %v393 = vadd.f32 %v363, %v389
        %394 = vrot.lane.b32.xlu0 %v370, 127
        %v395 = vpop.permute.xlu0 %394
        %396 = vrot.lane.b32.xlu0 %v371, 127
        %v397 = vpop.permute.xlu0 %396
        %398 = vrot.lane.b32.xlu0 %v372, 127
        %v399 = vpop.permute.xlu0 %398
        %400 = vrot.lane.b32.xlu0 %v373, 127
        %v401 = vpop.permute.xlu0 %400
        %s402 = vtos %v395
        %v403 = vstv %s402
        %s405 = vtos %v397
        %v406 = vstv %s405
        %s408 = vtos %v399
        %v409 = vstv %s408
        %s411 = vtos %v401
        %v412 = vstv %s411
        %v414 = vmul.f32 %v366, %v403
        %v415 = vmul.f32 %v367, %v406
        %v416 = vmul.f32 %v368, %v409
        %v417 = vmul.f32 %v369, %v412
        %422 = vrot.lane.b32.xlu0 %v414, 127
        %v423 = vpop.permute.xlu0 %422
        %424 = vrot.lane.b32.xlu0 %v415, 127
        %v425 = vpop.permute.xlu0 %424
        %426 = vrot.lane.b32.xlu0 %v416, 127
        %v427 = vpop.permute.xlu0 %426
        %428 = vrot.lane.b32.xlu0 %v417, 127
        %v429 = vpop.permute.xlu0 %428
        %v434 = vadd.f32 %v390, %v423
        %v435 = vadd.f32 %v391, %v425
        %v436 = vadd.f32 %v392, %v427
        %v437 = vadd.f32 %v393, %v429
        %438 = vrot.lane.b32.xlu0 %v370, 126
        %v439 = vpop.permute.xlu0 %438
        %440 = vrot.lane.b32.xlu0 %v371, 126
        %v441 = vpop.permute.xlu0 %440
        %442 = vrot.lane.b32.xlu0 %v372, 126
        %v443 = vpop.permute.xlu0 %442
        %444 = vrot.lane.b32.xlu0 %v373, 126
        %v445 = vpop.permute.xlu0 %444
        %s446 = vtos %v439
        %v447 = vstv %s446
        %s449 = vtos %v441
        %v450 = vstv %s449
        %s452 = vtos %v443
        %v453 = vstv %s452
        %s455 = vtos %v445
        %v456 = vstv %s455
        %v458 = vmul.f32 %v366, %v447
        %v459 = vmul.f32 %v367, %v450
        %v460 = vmul.f32 %v368, %v453
        %v461 = vmul.f32 %v369, %v456
        %466 = vrot.lane.b32.xlu0 %v458, 126
        %v467 = vpop.permute.xlu0 %466
        %468 = vrot.lane.b32.xlu0 %v459, 126
        %v469 = vpop.permute.xlu0 %468
        %470 = vrot.lane.b32.xlu0 %v460, 126
        %v471 = vpop.permute.xlu0 %470
        %472 = vrot.lane.b32.xlu0 %v461, 126
        %v473 = vpop.permute.xlu0 %472
        %v478 = vadd.f32 %v434, %v467
        %v479 = vadd.f32 %v435, %v469
        %v480 = vadd.f32 %v436, %v471
        %v481 = vadd.f32 %v437, %v473
        %s482 = sadd.s32 %s238, 2
        %s483 = scalar_lea.vmem %s236, %s482
        %v484 = vld [vmem:[%s483] sm:$0xff]
        %v485 = vld [vmem:[%s483 + $0x18] sm:$0xff]
        %v486 = vld [vmem:[%s483 + $0x30] sm:$0xff]
        %v487 = vld [vmem:[%s483 + $0x48] sm:$0xff]
        %v488 = vrot.slane %v239, 2
        %v489 = vrot.slane %v240, 2
        %v490 = vrot.slane %v241, 2
        %v491 = vrot.slane %v242, 2
        %s492 = vtos %v488
        %v493 = vstv %s492
        %s495 = vtos %v489
        %v496 = vstv %s495
        %s498 = vtos %v490
        %v499 = vstv %s498
        %s501 = vtos %v491
        %v502 = vstv %s501
        %v504 = vmul.f32 %v484, %v493
        %v505 = vmul.f32 %v485, %v496
        %v506 = vmul.f32 %v486, %v499
        %v507 = vmul.f32 %v487, %v502
        %v508 = vadd.f32 %v478, %v504
        %v509 = vadd.f32 %v479, %v505
        %v510 = vadd.f32 %v480, %v506
        %v511 = vadd.f32 %v481, %v507
        %512 = vrot.lane.b32.xlu0 %v488, 127
        %v513 = vpop.permute.xlu0 %512
        %514 = vrot.lane.b32.xlu0 %v489, 127
        %v515 = vpop.permute.xlu0 %514
        %516 = vrot.lane.b32.xlu0 %v490, 127
        %v517 = vpop.permute.xlu0 %516
        %518 = vrot.lane.b32.xlu0 %v491, 127
        %v519 = vpop.permute.xlu0 %518
        %s520 = vtos %v513
        %v521 = vstv %s520
        %s523 = vtos %v515
        %v524 = vstv %s523
        %s526 = vtos %v517
        %v527 = vstv %s526
        %s529 = vtos %v519
        %v530 = vstv %s529
        %v532 = vmul.f32 %v484, %v521
        %v533 = vmul.f32 %v485, %v524
        %v534 = vmul.f32 %v486, %v527
        %v535 = vmul.f32 %v487, %v530
        %540 = vrot.lane.b32.xlu0 %v532, 127
        %v541 = vpop.permute.xlu0 %540
        %542 = vrot.lane.b32.xlu0 %v533, 127
        %v543 = vpop.permute.xlu0 %542
        %544 = vrot.lane.b32.xlu0 %v534, 127
        %v545 = vpop.permute.xlu0 %544
        %546 = vrot.lane.b32.xlu0 %v535, 127
        %v547 = vpop.permute.xlu0 %546
        %v552 = vadd.f32 %v508, %v541
        %v553 = vadd.f32 %v509, %v543
        %v554 = vadd.f32 %v510, %v545
        %v555 = vadd.f32 %v511, %v547
        %556 = vrot.lane.b32.xlu0 %v488, 126
        %v557 = vpop.permute.xlu0 %556
        %558 = vrot.lane.b32.xlu0 %v489, 126
        %v559 = vpop.permute.xlu0 %558
        %560 = vrot.lane.b32.xlu0 %v490, 126
        %v561 = vpop.permute.xlu0 %560
        %562 = vrot.lane.b32.xlu0 %v491, 126
        %v563 = vpop.permute.xlu0 %562
        %s564 = vtos %v557
        %v565 = vstv %s564
        %s567 = vtos %v559
        %v568 = vstv %s567
        %s570 = vtos %v561
        %v571 = vstv %s570
        %s573 = vtos %v563
        %v574 = vstv %s573
        %v576 = vmul.f32 %v484, %v565
        %v577 = vmul.f32 %v485, %v568
        %v578 = vmul.f32 %v486, %v571
        %v579 = vmul.f32 %v487, %v574
        %584 = vrot.lane.b32.xlu0 %v576, 126
        %v585 = vpop.permute.xlu0 %584
        %586 = vrot.lane.b32.xlu0 %v577, 126
        %v587 = vpop.permute.xlu0 %586
        %588 = vrot.lane.b32.xlu0 %v578, 126
        %v589 = vpop.permute.xlu0 %588
        %590 = vrot.lane.b32.xlu0 %v579, 126
        %v591 = vpop.permute.xlu0 %590
        %v596 = vadd.f32 %v552, %v585
        %v597 = vadd.f32 %v553, %v587
        %v598 = vadd.f32 %v554, %v589
        %v599 = vadd.f32 %v555, %v591
        %v604 = vlaneseq
        %v605 = vshrl.u32 %v604, 7
        %v606 = vsub.s32 0, %v605
        %v607 = vrot.slane %v243, %v606
        %v608 = vlaneseq
        %v609 = vshrl.u32 %v608, 7
        %v610 = vsub.s32 0, %v609
        %v611 = vrot.slane %v244, %v610
        %v612 = vlaneseq
        %v613 = vshrl.u32 %v612, 7
        %v614 = vsub.s32 0, %v613
        %v615 = vrot.slane %v245, %v614
        %v616 = vlaneseq
        %v617 = vshrl.u32 %v616, 7
        %v618 = vsub.s32 0, %v617
        %v619 = vrot.slane %v246, %v618
        %620 = vset.pattern.permute.xlu0 0
        %621 = vperm.xlu0 %620, %v607
        %v622 = vpop.permute.xlu0 %621
        %624 = vset.pattern.permute.xlu0 0
        %625 = vperm.xlu0 %624, %v611
        %v626 = vpop.permute.xlu0 %625
        %628 = vset.pattern.permute.xlu0 0
        %629 = vperm.xlu0 %628, %v615
        %v630 = vpop.permute.xlu0 %629
        %632 = vset.pattern.permute.xlu0 0
        %633 = vperm.xlu0 %632, %v619
        %v634 = vpop.permute.xlu0 %633
        %v636 = vadd.f32 %v596, %v622
        %v637 = vadd.f32 %v597, %v626
        %v638 = vadd.f32 %v598, %v630
        %v639 = vadd.f32 %v599, %v634
        %v640 = vmax.f32 %v636, 0.0
        %v641 = vmax.f32 %v637, 0.0
        %v642 = vmax.f32 %v638, 0.0
        %v643 = vmax.f32 %v639, 0.0
        %v644 = vcombine.low %v640, %v642
        %v645 = vcombine.high %v640, %v642
        %v647 = vunpack.c.l.s4 1983009808
        %v648 = vunpack.c.0.s8 %v647
        %v649 = vlaneseq
        %v650 = vshrl.u32 %v649, 7
        %v651 = vsub.s32 %v648, %v650
        %v652 = vrot.slane %v644, %v651
        %v654 = vunpack.c.l.s4 1983009808
        %v655 = vunpack.c.0.s8 %v654
        %v656 = vlaneseq
        %v657 = vshrl.u32 %v656, 7
        %v658 = vsub.s32 %v655, %v657
        %v659 = vrot.slane %v645, %v658
        %v660 = vcombine.low %v641, %v643
        %v661 = vcombine.high %v641, %v643
        %v663 = vunpack.c.l.s4 1983009808
        %v664 = vunpack.c.0.s8 %v663
        %v665 = vlaneseq
        %v666 = vshrl.u32 %v665, 7
        %v667 = vsub.s32 %v664, %v666
        %v668 = vrot.slane %v660, %v667
        %v670 = vunpack.c.l.s4 1983009808
        %v671 = vunpack.c.0.s8 %v670
        %v672 = vlaneseq
        %v673 = vshrl.u32 %v672, 7
        %v674 = vsub.s32 %v671, %v673
        %v675 = vrot.slane %v661, %v674
        %v676 = vcombine.low %v652, %v668
        %v677 = vcombine.high %v652, %v668
        %v679 = vunpack.c.l.s4 1934713408
        %v680 = vunpack.c.0.s8 %v679
        %v681 = vlaneseq
        %v682 = vshrl.u32 %v681, 7
        %v683 = vsub.s32 %v680, %v682
        %v684 = vrot.slane %v676, %v683
        %v686 = vunpack.c.l.s4 1934713408
        %v687 = vunpack.c.0.s8 %v686
        %v688 = vlaneseq
        %v689 = vshrl.u32 %v688, 7
        %v690 = vsub.s32 %v687, %v689
        %v691 = vrot.slane %v677, %v690
        %v692 = vcombine.low %v659, %v675
        %v693 = vcombine.high %v659, %v675
        %v695 = vunpack.c.l.s4 1934713408
        %v696 = vunpack.c.0.s8 %v695
        %v697 = vlaneseq
        %v698 = vshrl.u32 %v697, 7
        %v699 = vsub.s32 %v696, %v698
        %v700 = vrot.slane %v692, %v699
        %v702 = vunpack.c.l.s4 1934713408
        %v703 = vunpack.c.0.s8 %v702
        %v704 = vlaneseq
        %v705 = vshrl.u32 %v704, 7
        %v706 = vsub.s32 %v703, %v705
        %v707 = vrot.slane %v693, %v706
        %v708 = vcombine.high %v684, 0.0
        %v709 = vcombine.high %v691, 0.0
        %v710 = vcombine.high %v700, 0.0
        %v711 = vcombine.high %v707, 0.0
        %713 = vrot.lane.b32.xlu0 %v708, 16
        %v714 = vpop.permute.xlu0 %713
        %717 = vrot.lane.b32.xlu0 %v691, 32
        %v718 = vpop.permute.xlu0 %717
        %721 = vrot.lane.b32.xlu0 %v709, 48
        %v722 = vpop.permute.xlu0 %721
        %725 = vrot.lane.b32.xlu0 %v700, 64
        %v726 = vpop.permute.xlu0 %725
        %729 = vrot.lane.b32.xlu0 %v710, 80
        %v730 = vpop.permute.xlu0 %729
        %733 = vrot.lane.b32.xlu0 %v707, 96
        %v734 = vpop.permute.xlu0 %733
        %737 = vrot.lane.b32.xlu0 %v711, 112
        %v738 = vpop.permute.xlu0 %737
        %vm740 = vcmask 130048
        %v741 = vsel %vm740, %v684, %v714
        %vm742 = vcmask 261120
        %v743 = vsel %vm742, %v741, %v718
        %vm744 = vcmask 392192
        %v745 = vsel %vm744, %v743, %v722
        %vm746 = vcmask 523264
        %v747 = vsel %vm746, %v745, %v726
        %vm748 = vcmask 654336
        %v749 = vsel %vm748, %v747, %v730
        %vm750 = vcmask 785408
        %v751 = vsel %vm750, %v749, %v734
        %vm752 = vcmask 916480
        %v753 = vsel %vm752, %v751, %v738
        %v754 = vpack.c.bf16 %v753, %v753
        %v755 = vld [vmem:[%s3] sm:$0xf]
        %v756 = vld [vmem:[%s4] sm:$0xff]
        %758 = vset.pattern.permute.xlu0 0
        %759 = vperm.xlu0 %758, %v756
        %v760 = vpop.permute.xlu0 %759
        %vm762 = vcmask 31744
        %v764 = vsel %vm762, %v755, 0
        %vm766 = vcmask 1041408
        %v768 = vsel %vm766, %v754, 0
        %770 = vmatprep.subr.bf16.mxu0 0
        %771 = vmatpush1.bf16.msra.mxu0 0
        %772 = vmatprep.subr.bf16.mxu0 0
        %773 = vmatpush1.bf16.msra.mxu0 0
        %774 = vmatprep.subr.bf16.mxu0 0
        %775 = vmatpush1.bf16.msra.mxu0 0
        %776 = vmatprep.subr.bf16.mxu0 0
        %777 = vmatpush1.bf16.msra.mxu0 0
        %778 = vmatprep.subr.bf16.mxu0 0
        %779 = vmatpush1.bf16.msra.mxu0 0
        %780 = vmatprep.subr.bf16.mxu0 0
        %781 = vmatpush1.bf16.msra.mxu0 0
        %782 = vmatprep.subr.bf16.mxu0 0
        %783 = vmatpush1.bf16.msra.mxu0 0
        %784 = vmatprep.subr.bf16.mxu0 0
        %785 = vmatpush1.bf16.msra.mxu0 %v768
        %786 = vmatprep.subr.bf16.mxu0 0
        %787 = vmatpush2.bf16.msra.mxu0 0
        %788 = vmatprep.subr.bf16.mxu0 0
        %789 = vmatpush2.bf16.msra.mxu0 0
        %790 = vmatprep.subr.bf16.mxu0 0
        %791 = vmatpush2.bf16.msra.mxu0 0
        %792 = vmatprep.subr.bf16.mxu0 0
        %793 = vmatpush2.bf16.msra.mxu0 0
        %794 = vmatprep.subr.bf16.mxu0 0
        %795 = vmatpush2.bf16.msra.mxu0 0
        %796 = vmatprep.subr.bf16.mxu0 0
        %797 = vmatpush2.bf16.msra.mxu0 0
        %798 = vmatprep.subr.bf16.mxu0 0
        %799 = vmatpush2.bf16.msra.mxu0 0
        %800 = vmatprep.subr.bf16.mxu0 0
        %801 = vmatpush2.bf16.msra.mxu0 0
        %802 = vmatprep.mubr.bf16.mxu0 0
        %803 = vmatmul.mubr.bf16.gmra.mxu0 %v764
        %v804 = vpop.f32.mrf.mxu0
        %v805 = vadd.f32 %v760, %v804
        %v806 = vpop.f32.mrf.mxu0
        %v807 = vpop.f32.mrf.mxu0
        %v808 = vpop.f32.mrf.mxu0
        %809 = vdwg.mxu0
        %v810 = vmax.f32 %v805, 0.0
        %811 = vst [vmem:[%s231] sm:$0xff] %v810
        %s812 = sand.u32 %s151, 1
        %s813 = scalar_lea.sflag [#allocation3], %s812
        %s814 = sand.u32 %s151, 1
        %s815 = smul.addr %s814, 8
        %s816 = scalar_lea.vmem [#allocation2], %s815
        // Predicated region
        $region41: #{tpu_custom_call.1} parent=39 // pred_check
          %p817 = pneg %p161
        $region42: #{tpu_custom_call.1} parent=39 // pred_check_branch
          %819 = sbr.rel (%p817) target = $region44
        $region43: #{tpu_custom_call.1} parent=39 // pred_region
          %s821 = ssub.s32 128, 128
          %822 = vsyncadd %s813, %s821
          %s823 = smul.addr %s23, 2
          %s824 = sadd.s32 %s24, %s823
          %s825 = smul.addr %s824, 128
          %s826 = scalar_lea.hbm %s5, %s825
          %s828 = sshll.u32 %s816, 4
          %s829 = int_to_ptr.vmem [resolvable:$true] %s828
          %831 = dma.vmem_to_hbm [thread:$0]  %s829, 128, %s826, %s813
        $region44: #{tpu_custom_call.1} parent=39 // pred_fallthru
          _
      $region40: #{tpu_custom_call.1} parent=5 // pred_fallthru
        _
      %p832 = scmp.le.s32.totalorder 2, %s14
      // Predicated region
      $region45: #{tpu_custom_call.1} parent=5 // pred_check
        %p833 = pneg %p832
      $region46: #{tpu_custom_call.1} parent=5 // pred_check_branch
        %835 = sbr.rel (%p833) target = $region48
      $region47: #{tpu_custom_call.1} parent=5 // pred_region
        %s836 = ssub.s32 %s14, 2
        // Predicated region
        $region49: #{tpu_custom_call.1} parent=47 // pred_check
          %p837 = pneg %p167
        $region50: #{tpu_custom_call.1} parent=47 // pred_check_branch
          %839 = sbr.rel (%p837) target = $region52
        $region51: #{tpu_custom_call.1} parent=47 // pred_region
          %s840 = sand.u32 %s152, 1
          %s841 = scalar_lea.sflag [#allocation3], %s840
          %s842 = sand.u32 %s152, 1
          %s843 = smul.addr %s842, 8
          %s844 = scalar_lea.vmem [#allocation2], %s843
          %845 = dma.done %s841, 128
        $region52: #{tpu_custom_call.1} parent=47 // pred_fallthru
          _
      $region48: #{tpu_custom_call.1} parent=5 // pred_fallthru
        _
    $region6: #{tpu_custom_call.1} parent=1 // loop_footer
      %s18 = sadd.s32 1, %s14
    $region7: #{tpu_custom_call.1} parent=1 // loop_footer_branch
      %13 = sbr.rel target = $region3
    $region8: #{tpu_custom_call.1} parent=1 // loop_exit
      _
    %846 = vsyncpa [#allocation3], 1
    %s847 = scalar_lea.sflag [#allocation3], 1
    %848 = vsyncpa %s847, 1

</llo_original>
